<compile_context>
chip_gen: v7x
topology: tpu7x:2x2x1
jax: 0.10.0
libtpu: 0.0.40
codegen_flags: <defaults>
</compile_context>

<pallas_src>
import math

import jax
import jax.numpy as jnp
from jax.experimental import pallas as pl
from jax.experimental.pallas import tpu as pltpu


def _attn_body(q_ref, k_ref, v_ref, m_ref, out_ref, score_ref):
    """One grid step: TH heads x TQ query rows against the full key length."""
    q = q_ref[0]              # (TH, TQ, D)
    k = k_ref[0]              # (TH, L,  D)
    v = v_ref[0]              # (TH, L,  D)
    d = q.shape[-1]

    # Fold 1/sqrt(d) into the small q tile (not the (TH,TQ,L) f32 score tile).
    q = q * (1.0 / math.sqrt(d))

    # QK^T as a contraction over the feature dim -> MXU, no XLU transpose of K.
    s = jnp.einsum("hqd,hkd->hqk", q, k, preferred_element_type=jnp.float32)

    if m_ref is not None:
        m = m_ref[0]          # (1 or TH, TQ, L) int8; broadcasts over heads
        s = jnp.where(m == 0, jnp.float32(-1e9), s)

    # Numerically stable softmax over the (fully resident) key axis.
    s_max = jnp.max(s, axis=-1, keepdims=True)
    e = jnp.exp(s - s_max)
    p = e * pl.reciprocal(jnp.sum(e, axis=-1, keepdims=True), approx=False)

    # Single cast of the dominant (TH,TQ,L) tile, reused for both consumers.
    p_lo = p.astype(score_ref.dtype)
    score_ref[0] = p_lo
    p_mm = p_lo if score_ref.dtype == v.dtype else p.astype(v.dtype)
    out_ref[0] = jnp.einsum("hqk,hkd->hqd", p_mm, v,
                            preferred_element_type=jnp.float32
                            ).astype(out_ref.dtype)


def _sdpa_kernel(q_ref, k_ref, v_ref, out_ref, score_ref):
    _attn_body(q_ref, k_ref, v_ref, None, out_ref, score_ref)


def _sdpa_kernel_masked(q_ref, k_ref, v_ref, m_ref, out_ref, score_ref):
    _attn_body(q_ref, k_ref, v_ref, m_ref, out_ref, score_ref)


def _vmem_plan():
    """Generation-aware VMEM plan: (per-step tile budget, vmem_limit_bytes)."""
    cap = None
    try:
        cap = getattr(pltpu.get_tpu_info(), "vmem_capacity_bytes", None)
    except Exception:
        cap = None
    if not cap:
        cap = 64 * 1024 * 1024                  # conservative: v7x per-TC VMEM
    # v7x (64 MiB):  limit 48 MiB, budget 24 MiB.
    # v5e/v6e (128 MiB): limit 96 MiB, budget 48 MiB.
    limit = min(int(cap * 3 // 4), 100 * 1024 * 1024)
    budget = min(limit // 2, 48 * 1024 * 1024)
    return budget, limit


def _pick_tiles(H, L, D, in_bytes, score_bytes, budget_bytes):
    """Pick (head tile TH, query tile TQ) so one grid step — including the f32
    softmax intermediates and the double-buffered I/O tiles — fits the budget.
    Prefers a large TQ (long dense score stores), then the largest TH that
    fits (K/V residency cost scales with TH*L*D, so TH is the cheap axis to
    shrink on v7x)."""
    tq_cands = [c for c in (512, 256, 128) if L > c and L % c == 0] or [L]

    def step_bytes(th, tq):
        io = th * tq * D * in_bytes           # q tile
        io += 2 * th * L * D * in_bytes       # k + v tiles (full key length)
        io += th * tq * D * in_bytes          # out tile
        io += th * tq * L * score_bytes       # score tile
        io += th * tq * L                     # int8 mask tile (worst case)
        live = 3 * th * tq * L * 4            # f32 s / e / p intermediates
        live += th * tq * L * score_bytes     # low-precision p copy
        return 2 * io + live                  # I/O tiles are double-buffered

    for tq in tq_cands:
        for th in range(min(H, 16), 0, -1):
            if H % th == 0 and step_bytes(th, tq) <= budget_bytes:
                return th, tq
    return 1, tq_cands[-1]


def scale_dot_product_attention(q, k, v, mask=None):
    """Pallas TPU scale-dot-product attention. Returns (out, score)."""
    B, H, L, D = k.shape
    budget, vmem_limit = _vmem_plan()
    TH, TQ = _pick_tiles(H, L, D, q.dtype.itemsize, q.dtype.itemsize, budget)
    grid = (B, H // TH, L // TQ)

    q_spec = pl.BlockSpec((1, TH, TQ, D), lambda b, h, i: (b, h, i, 0))
    kv_spec = pl.BlockSpec((1, TH, L, D), lambda b, h, i: (b, h, 0, 0))
    score_spec = pl.BlockSpec((1, TH, TQ, L), lambda b, h, i: (b, h, i, 0))

    out_shapes = (
        jax.ShapeDtypeStruct((B, H, L, D), q.dtype),
        jax.ShapeDtypeStruct((B, H, L, L), q.dtype),
    )

    # Query-tile axis is "arbitrary": on v7x megacore only B/H get sharded, so
    # the resident K/V blocks are fetched once per (b, h), not once per core.
    cparams = pltpu.CompilerParams(
        dimension_semantics=("parallel", "parallel", "arbitrary"),
        vmem_limit_bytes=vmem_limit)

    in_bytes = q.dtype.itemsize
    flops = 4 * B * H * L * L * D                   # QK^T + PV
    transcendentals = B * H * L * L                 # exp
    bytes_accessed = (4 * B * H * L * D + B * H * L * L) * in_bytes

    if mask is None:
        cost = pl.CostEstimate(flops=flops, transcendentals=transcendentals,
                               bytes_accessed=bytes_accessed)
        out, score = pl.pallas_call(
            _sdpa_kernel,
            out_shape=out_shapes,
            grid_spec=pltpu.PrefetchScalarGridSpec(
                num_scalar_prefetch=0,
                grid=grid,
                in_specs=[q_spec, kv_spec, kv_spec],
                out_specs=[q_spec, score_spec]),
            compiler_params=cparams,
            cost_estimate=cost,
        )(q, k, v)
        return out, score

    # Masked path: keep the mask un-broadcast over batch AND head (int8) so
    # its HBM footprint / DMA traffic stays O(mb*mh*L*L) bytes; it is re-used
    # across heads/batches via the index_map instead.
    m = jnp.asarray(mask)
    if m.ndim < 4:
        m = m.reshape((1,) * (4 - m.ndim) + m.shape)
    m = (m != 0).astype(jnp.int8)            # exact masked_fill(mask == 0)
    if m.shape[2] != L or m.shape[3] != L:   # only expand the L x L dims
        m = jnp.broadcast_to(m, m.shape[:2] + (L, L))
    if m.shape[1] not in (1, H):
        m = jnp.broadcast_to(m, (m.shape[0], H, L, L))
    mb, mh = m.shape[0], m.shape[1]

    if mh == 1:
        mblk = (1, 1, TQ, L)
        m_map = (lambda b, h, i: (b, 0, i, 0)) if mb == B else \
                (lambda b, h, i: (0, 0, i, 0))
    else:
        mblk = (1, TH, TQ, L)
        m_map = (lambda b, h, i: (b, h, i, 0)) if mb == B else \
                (lambda b, h, i: (0, h, i, 0))
    m_spec = pl.BlockSpec(mblk, m_map)

    cost = pl.CostEstimate(flops=flops, transcendentals=transcendentals,
                           bytes_accessed=bytes_accessed + mb * mh * L * L)
    out, score = pl.pallas_call(
        _sdpa_kernel_masked,
        out_shape=out_shapes,
        grid_spec=pltpu.PrefetchScalarGridSpec(
            num_scalar_prefetch=0,
            grid=grid,
            in_specs=[q_spec, kv_spec, kv_spec, m_spec],
            out_specs=[q_spec, score_spec]),
        compiler_params=cparams,
        cost_estimate=cost,
    )(q, k, v, m)
    return out, score


def _reference(q, k, v, mask=None):
    d = k.shape[-1]
    s = jnp.einsum("bhqd,bhkd->bhqk", q, k) / math.sqrt(d)
    if mask is not None:
        s = jnp.where(mask == 0, -1e9, s)
    p = jax.nn.softmax(s, axis=-1)
    return jnp.einsum("bhqk,bhkd->bhqd", p, v), p


if __name__ == "__main__":
    B, H, L, D = 2, 4, 8, 32
    key = jax.random.PRNGKey(0)
    kq, kk, kv, km = jax.random.split(key, 4)
    q = jax.random.normal(kq, (B, H, L, D), dtype=jnp.float32)
    k = jax.random.normal(kk, (B, H, L, D), dtype=jnp.float32)
    v = jax.random.normal(kv, (B, H, L, D), dtype=jnp.float32)

    # No-mask path (module's default call signature).
    out, score = scale_dot_product_attention(q, k, v, mask=None)
    jax.block_until_ready((out, score))

    # Masked path (exercise masked_fill semantics too).
    mask = (jax.random.uniform(km, (B, 1, L, L)) > 0.3).astype(jnp.int32)
    out_m, score_m = scale_dot_product_attention(q, k, v, mask=mask)
    jax.block_until_ready((out_m, score_m))

    # Check against pure-JAX reference.
    ref_out, ref_score = _reference(q, k, v)
    ref_out_m, ref_score_m = _reference(q, k, v, mask)
    assert jnp.allclose(out, ref_out, atol=1e-5, rtol=1e-5)
    assert jnp.allclose(score, ref_score, atol=1e-5, rtol=1e-5)
    assert jnp.allclose(out_m, ref_out_m, atol=1e-5, rtol=1e-5)
    assert jnp.allclose(score_m, ref_score_m, atol=1e-5, rtol=1e-5)

    print("KERNEL_OK")
</pallas_src>

<mosaic_0001>
module attributes {stable_mosaic.version = 11 : i64} {
  func.func @_sdpa_kernel(%arg0: i32, %arg1: i32, %arg2: i32, %arg3: memref<1x4x8x32xf32, #tpu.memory_space<vmem>>, %arg4: memref<1x4x8x32xf32, #tpu.memory_space<vmem>>, %arg5: memref<1x4x8x32xf32, #tpu.memory_space<vmem>>, %arg6: memref<1x4x8x32xf32, #tpu.memory_space<vmem>>, %arg7: memref<1x4x8x8xf32, #tpu.memory_space<vmem>>) attributes {dimension_semantics = [#tpu.dimension_semantics<parallel>, #tpu.dimension_semantics<parallel>, #tpu.dimension_semantics<arbitrary>], iteration_bounds = array<i64: 2, 1, 1>, scalar_prefetch = 0 : i64, scratch_operands = 0 : i64, tpu.core_type = #tpu.core_type<tc>, window_params = [{transform_indices = @transform_0, window_bounds = array<i64: 1, 4, 8, 32>}, {transform_indices = @transform_1, window_bounds = array<i64: 1, 4, 8, 32>}, {transform_indices = @transform_2, window_bounds = array<i64: 1, 4, 8, 32>}, {transform_indices = @transform_3, window_bounds = array<i64: 1, 4, 8, 32>}, {transform_indices = @transform_4, window_bounds = array<i64: 1, 4, 8, 8>}]} {
    %c0 = arith.constant 0 : index
    %c0_0 = arith.constant 0 : index
    %c0_1 = arith.constant 0 : index
    %c0_2 = arith.constant 0 : index
    %0 = vector.load %arg3[%c0, %c0_0, %c0_1, %c0_2] : memref<1x4x8x32xf32, #tpu.memory_space<vmem>>, vector<1x4x8x32xf32>
    %1 = vector.shape_cast %0 : vector<1x4x8x32xf32> to vector<4x8x32xf32>
    %c0_3 = arith.constant 0 : index
    %c0_4 = arith.constant 0 : index
    %c0_5 = arith.constant 0 : index
    %c0_6 = arith.constant 0 : index
    %2 = vector.load %arg4[%c0_3, %c0_4, %c0_5, %c0_6] : memref<1x4x8x32xf32, #tpu.memory_space<vmem>>, vector<1x4x8x32xf32>
    %3 = vector.shape_cast %2 : vector<1x4x8x32xf32> to vector<4x8x32xf32>
    %c0_7 = arith.constant 0 : index
    %c0_8 = arith.constant 0 : index
    %c0_9 = arith.constant 0 : index
    %c0_10 = arith.constant 0 : index
    %4 = vector.load %arg5[%c0_7, %c0_8, %c0_9, %c0_10] : memref<1x4x8x32xf32, #tpu.memory_space<vmem>>, vector<1x4x8x32xf32>
    %5 = vector.shape_cast %4 : vector<1x4x8x32xf32> to vector<4x8x32xf32>
    %cst = arith.constant 0.176776692 : f32
    %6 = vector.broadcast %cst : f32 to vector<4x8x32xf32>
    %7 = arith.mulf %1, %6 : vector<4x8x32xf32>
    "tpu.trace_start"() <{level = 10 : i32, message = "hqd,hkd->hqk"}> : () -> ()
    %cst_11 = arith.constant dense<0.000000e+00> : vector<4x8x8xf32>
    %8 = tpu.matmul %7, %3, %cst_11 {dimension_numbers = #tpu.dot_dimension_numbers<[2], [2], [1], [1], [0, 0, 0, 1, 1, 1], [0], [0]>} : vector<4x8x32xf32>, vector<4x8x32xf32>, vector<4x8x8xf32> -> vector<4x8x8xf32>
    "tpu.trace_stop"() : () -> ()
    %cst_12 = arith.constant dense<0xFF800000> : vector<4x8xf32>
    %9 = vector.multi_reduction <maximumf>, %8, %cst_12 [2] : vector<4x8x8xf32> to vector<4x8xf32>
    %10 = vector.shape_cast %9 : vector<4x8xf32> to vector<4x8x1xf32>
    %11 = vector.broadcast %10 : vector<4x8x1xf32> to vector<4x8x8xf32>
    %12 = arith.subf %8, %11 : vector<4x8x8xf32>
    %13 = math.exp %12 : vector<4x8x8xf32>
    %cst_13 = arith.constant dense<0.000000e+00> : vector<4x8xf32>
    %14 = vector.multi_reduction <add>, %13, %cst_13 [2] : vector<4x8x8xf32> to vector<4x8xf32>
    %15 = vector.shape_cast %14 : vector<4x8xf32> to vector<4x8x1xf32>
    %16 = tpu.reciprocal %15 : vector<4x8x1xf32> -> vector<4x8x1xf32>
    %17 = vector.broadcast %16 : vector<4x8x1xf32> to vector<4x8x8xf32>
    %18 = arith.mulf %13, %17 : vector<4x8x8xf32>
    %c0_14 = arith.constant 0 : index
    %c0_15 = arith.constant 0 : index
    %c0_16 = arith.constant 0 : index
    %c0_17 = arith.constant 0 : index
    %19 = vector.load %arg7[%c0_14, %c0_15, %c0_16, %c0_17] : memref<1x4x8x8xf32, #tpu.memory_space<vmem>>, vector<1x4x8x8xf32>
    %20 = vector.shape_cast %19 : vector<1x4x8x8xf32> to vector<4x8x8xf32>
    %21 = vector.shape_cast %18 : vector<4x8x8xf32> to vector<1x4x8x8xf32>
    tpu.vector_store %arg7[%c0_14, %c0_15, %c0_16, %c0_17], %21 {strides = array<i32>} : memref<1x4x8x8xf32, #tpu.memory_space<vmem>>, vector<1x4x8x8xf32>,
    "tpu.trace_start"() <{level = 10 : i32, message = "hqk,hkd->hqd"}> : () -> ()
    %cst_18 = arith.constant dense<0.000000e+00> : vector<4x8x32xf32>
    %22 = tpu.matmul %18, %5, %cst_18 {dimension_numbers = #tpu.dot_dimension_numbers<[2], [1], [1], [2], [0, 0, 0, 1, 1, 2], [0], [0]>} : vector<4x8x8xf32>, vector<4x8x32xf32>, vector<4x8x32xf32> -> vector<4x8x32xf32>
    "tpu.trace_stop"() : () -> ()
    %c0_19 = arith.constant 0 : index
    %c0_20 = arith.constant 0 : index
    %c0_21 = arith.constant 0 : index
    %c0_22 = arith.constant 0 : index
    %23 = vector.load %arg6[%c0_19, %c0_20, %c0_21, %c0_22] : memref<1x4x8x32xf32, #tpu.memory_space<vmem>>, vector<1x4x8x32xf32>
    %24 = vector.shape_cast %23 : vector<1x4x8x32xf32> to vector<4x8x32xf32>
    %25 = vector.shape_cast %22 : vector<4x8x32xf32> to vector<1x4x8x32xf32>
    tpu.vector_store %arg6[%c0_19, %c0_20, %c0_21, %c0_22], %25 {strides = array<i32>} : memref<1x4x8x32xf32, #tpu.memory_space<vmem>>, vector<1x4x8x32xf32>,
    return
  }
  func.func @transform_0(%arg0: i32, %arg1: i32, %arg2: i32) -> (i32, i32, i32, i32) {
    %c0_i32 = arith.constant 0 : i32
    %c0_i32_0 = arith.constant 0 : i32
    return %arg0, %arg1, %arg2, %c0_i32 : i32, i32, i32, i32
  }
  func.func @transform_1(%arg0: i32, %arg1: i32, %arg2: i32) -> (i32, i32, i32, i32) {
    %c0_i32 = arith.constant 0 : i32
    %c0_i32_0 = arith.constant 0 : i32
    %c0_i32_1 = arith.constant 0 : i32
    return %arg0, %arg1, %c0_i32, %c0_i32_0 : i32, i32, i32, i32
  }
  func.func @transform_2(%arg0: i32, %arg1: i32, %arg2: i32) -> (i32, i32, i32, i32) {
    %c0_i32 = arith.constant 0 : i32
    %c0_i32_0 = arith.constant 0 : i32
    %c0_i32_1 = arith.constant 0 : i32
    return %arg0, %arg1, %c0_i32, %c0_i32_0 : i32, i32, i32, i32
  }
  func.func @transform_3(%arg0: i32, %arg1: i32, %arg2: i32) -> (i32, i32, i32, i32) {
    %c0_i32 = arith.constant 0 : i32
    %c0_i32_0 = arith.constant 0 : i32
    return %arg0, %arg1, %arg2, %c0_i32 : i32, i32, i32, i32
  }
  func.func @transform_4(%arg0: i32, %arg1: i32, %arg2: i32) -> (i32, i32, i32, i32) {
    %c0_i32 = arith.constant 0 : i32
    %c0_i32_0 = arith.constant 0 : i32
    return %arg0, %arg1, %arg2, %c0_i32 : i32, i32, i32, i32
  }
}

</mosaic_0001>

<llo_original>
// kernel: tpu_custom_call.1
$region0: #{tpu_custom_call.1}
  #allocation0 [shape = 'u32[]', space=smem, size = 0x4, offset = 0x4, fixed_abs, tag = 'smem constant byte address 0x4 - core index']
  #allocation1 [shape = 'u32[144,128]{1,0:T(1,128)}', space=vmem, size = 0x12000, scoped, tag = 'internal scratch']
  %s0 = inlined_call_operand.hbm [shape: f32[2,4,8,32], index: 0, kind: input, shape index: {}]
  %s1 = inlined_call_operand.hbm [shape: f32[2,4,8,32], index: 1, kind: input, shape index: {}]
  %s2 = inlined_call_operand.hbm [shape: f32[2,4,8,32], index: 2, kind: input, shape index: {}]
  %s3 = inlined_call_operand.hbm [shape: f32[2,4,8,32], index: 3, kind: output, shape index: {0}]
  %s4 = inlined_call_operand.hbm [shape: f32[2,4,8,8], index: 4, kind: output, shape index: {1}]
  %5 = xla_tuple %s3, %s4
  %s6 = sld [smem:[#allocation0]]
  $region65: #{tpu_custom_call.1} parent=0
    _
  %s8 = ssub.s32 1, %s6
  %s9 = scalar_select 0, %s8, %s6
  $region1: #{tpu_custom_call.1} parent=0
    #allocation2 [shape = 'u8[32768]{0}', space=vmem, size = 0x8000, scoped, tag = 'input window, operand 0']
    #allocation3 [shape = 's32[2]{0}', space=sflag, size = 0x8, scoped, tag = 'scoped memory for tpu_custom_call.1']
    #allocation4 [shape = 's32[2]{0}', space=sflag, size = 0x8, scoped, tag = 'scoped memory for tpu_custom_call.1']
    #allocation5 [shape = 'u8[32768]{0}', space=vmem, size = 0x8000, scoped, tag = 'input window, operand 1']
    #allocation6 [shape = 's32[2]{0}', space=sflag, size = 0x8, scoped, tag = 'scoped memory for tpu_custom_call.1']
    #allocation7 [shape = 'u8[32768]{0}', space=vmem, size = 0x8000, scoped, tag = 'input window, operand 2']
    #allocation8 [shape = 'u8[32768]{0}', space=vmem, size = 0x8000, scoped, tag = 'output window, operand 0']
    #allocation9 [shape = 'u8[32768]{0}', space=vmem, size = 0x8000, scoped, tag = 'output window, operand 1']
    #allocation10 [shape = 's32[2]{0}', space=sflag, size = 0x8, scoped, tag = 'scoped memory for tpu_custom_call.1']
    %10 = vsyncpa [#allocation3], 0
    %s11 = scalar_lea.sflag [#allocation3], 1
    %12 = vsyncpa %s11, 0
    %13 = vsyncpa [#allocation6], 0
    %s14 = scalar_lea.sflag [#allocation6], 1
    %15 = vsyncpa %s14, 0
    %16 = vsyncpa [#allocation4], 0
    %s17 = scalar_lea.sflag [#allocation4], 1
    %18 = vsyncpa %s17, 0
    %19 = vsyncpa [#allocation10], 0
    %s20 = scalar_lea.sflag [#allocation10], 1
    %21 = vsyncpa %s20, 0
    loop: start=0, step=1, limit=4
    $region2: #{tpu_custom_call.1} parent=1 // loop_pre_header
      _
    $region3: #{tpu_custom_call.1} parent=1 // loop_header
      %s23 = sphi 0, %s27
      %p24 = scmp.ge.s32.totalorder %s23, 4
      %s30 = sphi 0, %s49
      %s31 = sphi 0, %s45
      %s32 = sphi 0, %s41
      %s33 = sphi 0, %s30
      %s34 = sphi 0, %s31
      %s35 = sphi 0, %s32
      %s36 = sphi 0, %s33
      %s37 = sphi 0, %s34
      %s38 = sphi 0, %s35
      %s56 = sphi 0, %s58
      %s59 = sphi 0, %s56
      %s60 = sphi 0, %s59
      %s76 = sphi 0, %s60
      %s84 = sphi 0, %s86
      %s87 = sphi 0, %s84
      %s88 = sphi 0, %s87
      %s104 = sphi 0, %s88
      %s112 = sphi 0, %s114
      %s115 = sphi 0, %s112
      %s116 = sphi 0, %s115
      %s132 = sphi 0, %s116
      %s142 = sphi 0, %s144
      %s145 = sphi 0, %s142
      %s146 = sphi 0, %s145
      %s162 = sphi 0, %s146
      %s172 = sphi 0, %s174
      %s175 = sphi 0, %s172
      %s176 = sphi 0, %s175
      %s192 = sphi 0, %s176
    $region4: #{tpu_custom_call.1} parent=1 // loop_header_branch
      %26 = sbr.rel (%p24) target = $region8
    $region5: #{tpu_custom_call.1} parent=1 // loop_body
      %s28 = ssub.s32 %s23, 1
      %s29 = ssub.s32 %s23, 2
      %s39 = sadd.s32 1, %s32
      %p40 = scmp.ge.s32.totalorder %s39, 1
      %s41 = scalar_select %p40, 0, %s39
      %s42 = sadd.s32 1, %s31
      %s43 = scalar_select %p40, %s42, %s31
      %p44 = scmp.ge.s32.totalorder %s43, 1
      %s45 = scalar_select %p44, 0, %s43
      %s46 = sadd.s32 1, %s30
      %s47 = scalar_select %p44, %s46, %s30
      %p48 = scmp.ge.s32.totalorder %s47, 2
      %s49 = scalar_select %p48, 0, %s47
      %s50 = ssub.s32 %s30, %s49
      %s51 = ssub.s32 %s31, %s45
      %s52 = sor.u32 %s50, %s51
      %s53 = ssub.s32 %s32, %s41
      %s54 = sor.u32 %s52, %s53
      %p55 = scmp.eq.s32.totalorder %s54, 0
      %s57 = sadd.s32 %s56, 1
      %s58 = scalar_select %p55, %s56, %s57
      %p61 = pneg %p55
      %p62 = scmp.eq.s32.totalorder %s23, 1
      %p63 = por %p61, %p62
      %p64 = scmp.ne.s32.totalorder %s56, %s59
      %p65 = scmp.eq.s32.totalorder %s23, 0
      %p66 = por %p64, %p65
      %p67 = scmp.ne.s32.totalorder %s56, %s59
      %p68 = scmp.eq.s32.totalorder %s28, 1
      %p69 = por %p67, %p68
      %p70 = scmp.ne.s32.totalorder %s59, %s60
      %p71 = scmp.eq.s32.totalorder %s28, 0
      %p72 = por %p70, %p71
      %p73 = scmp.ne.s32.totalorder %s59, %s60
      %p74 = scmp.eq.s32.totalorder %s29, 1
      %p75 = por %p73, %p74
      %p77 = scmp.ne.s32.totalorder %s60, %s76
      %p78 = scmp.eq.s32.totalorder %s29, 0
      %p79 = por %p77, %p78
      %s80 = ssub.s32 %s30, %s49
      %s81 = ssub.s32 %s31, %s45
      %s82 = sor.u32 %s80, %s81
      %p83 = scmp.eq.s32.totalorder %s82, 0
      %s85 = sadd.s32 %s84, 1
      %s86 = scalar_select %p83, %s84, %s85
      %p89 = pneg %p83
      %p90 = scmp.eq.s32.totalorder %s23, 1
      %p91 = por %p89, %p90
      %p92 = scmp.ne.s32.totalorder %s84, %s87
      %p93 = scmp.eq.s32.totalorder %s23, 0
      %p94 = por %p92, %p93
      %p95 = scmp.ne.s32.totalorder %s84, %s87
      %p96 = scmp.eq.s32.totalorder %s28, 1
      %p97 = por %p95, %p96
      %p98 = scmp.ne.s32.totalorder %s87, %s88
      %p99 = scmp.eq.s32.totalorder %s28, 0
      %p100 = por %p98, %p99
      %p101 = scmp.ne.s32.totalorder %s87, %s88
      %p102 = scmp.eq.s32.totalorder %s29, 1
      %p103 = por %p101, %p102
      %p105 = scmp.ne.s32.totalorder %s88, %s104
      %p106 = scmp.eq.s32.totalorder %s29, 0
      %p107 = por %p105, %p106
      %s108 = ssub.s32 %s30, %s49
      %s109 = ssub.s32 %s31, %s45
      %s110 = sor.u32 %s108, %s109
      %p111 = scmp.eq.s32.totalorder %s110, 0
      %s113 = sadd.s32 %s112, 1
      %s114 = scalar_select %p111, %s112, %s113
      %p117 = pneg %p111
      %p118 = scmp.eq.s32.totalorder %s23, 1
      %p119 = por %p117, %p118
      %p120 = scmp.ne.s32.totalorder %s112, %s115
      %p121 = scmp.eq.s32.totalorder %s23, 0
      %p122 = por %p120, %p121
      %p123 = scmp.ne.s32.totalorder %s112, %s115
      %p124 = scmp.eq.s32.totalorder %s28, 1
      %p125 = por %p123, %p124
      %p126 = scmp.ne.s32.totalorder %s115, %s116
      %p127 = scmp.eq.s32.totalorder %s28, 0
      %p128 = por %p126, %p127
      %p129 = scmp.ne.s32.totalorder %s115, %s116
      %p130 = scmp.eq.s32.totalorder %s29, 1
      %p131 = por %p129, %p130
      %p133 = scmp.ne.s32.totalorder %s116, %s132
      %p134 = scmp.eq.s32.totalorder %s29, 0
      %p135 = por %p133, %p134
      %s136 = ssub.s32 %s30, %s49
      %s137 = ssub.s32 %s31, %s45
      %s138 = sor.u32 %s136, %s137
      %s139 = ssub.s32 %s32, %s41
      %s140 = sor.u32 %s138, %s139
      %p141 = scmp.eq.s32.totalorder %s140, 0
      %s143 = sadd.s32 %s142, 1
      %s144 = scalar_select %p141, %s142, %s143
      %p147 = pneg %p141
      %p148 = scmp.eq.s32.totalorder %s23, 1
      %p149 = por %p147, %p148
      %p150 = scmp.ne.s32.totalorder %s142, %s145
      %p151 = scmp.eq.s32.totalorder %s23, 0
      %p152 = por %p150, %p151
      %p153 = scmp.ne.s32.totalorder %s142, %s145
      %p154 = scmp.eq.s32.totalorder %s28, 1
      %p155 = por %p153, %p154
      %p156 = scmp.ne.s32.totalorder %s145, %s146
      %p157 = scmp.eq.s32.totalorder %s28, 0
      %p158 = por %p156, %p157
      %p159 = scmp.ne.s32.totalorder %s145, %s146
      %p160 = scmp.eq.s32.totalorder %s29, 1
      %p161 = por %p159, %p160
      %p163 = scmp.ne.s32.totalorder %s146, %s162
      %p164 = scmp.eq.s32.totalorder %s29, 0
      %p165 = por %p163, %p164
      %s166 = ssub.s32 %s30, %s49
      %s167 = ssub.s32 %s31, %s45
      %s168 = sor.u32 %s166, %s167
      %s169 = ssub.s32 %s32, %s41
      %s170 = sor.u32 %s168, %s169
      %p171 = scmp.eq.s32.totalorder %s170, 0
      %s173 = sadd.s32 %s172, 1
      %s174 = scalar_select %p171, %s172, %s173
      %p177 = pneg %p171
      %p178 = scmp.eq.s32.totalorder %s23, 1
      %p179 = por %p177, %p178
      %p180 = scmp.ne.s32.totalorder %s172, %s175
      %p181 = scmp.eq.s32.totalorder %s23, 0
      %p182 = por %p180, %p181
      %p183 = scmp.ne.s32.totalorder %s172, %s175
      %p184 = scmp.eq.s32.totalorder %s28, 1
      %p185 = por %p183, %p184
      %p186 = scmp.ne.s32.totalorder %s175, %s176
      %p187 = scmp.eq.s32.totalorder %s28, 0
      %p188 = por %p186, %p187
      %p189 = scmp.ne.s32.totalorder %s175, %s176
      %p190 = scmp.eq.s32.totalorder %s29, 1
      %p191 = por %p189, %p190
      %p193 = scmp.ne.s32.totalorder %s176, %s192
      %p194 = scmp.eq.s32.totalorder %s29, 0
      %p195 = por %p193, %p194
      %p196 = scmp.le.s32.totalorder 1, %s23
      %p197 = scmp.lt.s32.totalorder %s23, 3
      %p198 = pnand %p196, %p197
      %p199 = pneg %p198
      // Predicated region
      $region9: #{tpu_custom_call.1} parent=5 // pred_check
        _
      $region10: #{tpu_custom_call.1} parent=5 // pred_check_branch
        %201 = sbr.rel (%p198) target = $region12
      $region11: #{tpu_custom_call.1} parent=5 // pred_region
        %s202 = ssub.s32 %s23, 1
      $region12: #{tpu_custom_call.1} parent=5 // pred_fallthru
        _
      %p203 = scmp.lt.s32.totalorder %s23, 2
      // Predicated region
      $region13: #{tpu_custom_call.1} parent=5 // pred_check
        %p204 = pneg %p203
      $region14: #{tpu_custom_call.1} parent=5 // pred_check_branch
        %206 = sbr.rel (%p204) target = $region16
      $region15: #{tpu_custom_call.1} parent=5 // pred_region
        // Predicated region
        $region17: #{tpu_custom_call.1} parent=15 // pred_check
          %p207 = pneg %p66
        $region18: #{tpu_custom_call.1} parent=15 // pred_check_branch
          %209 = sbr.rel (%p207) target = $region20
        $region19: #{tpu_custom_call.1} parent=15 // pred_region
          %s210 = sand.u32 %s56, 1
          %s211 = scalar_lea.sflag [#allocation3], %s210
          %s212 = sand.u32 %s56, 1
          %s213 = smul.addr %s212, 32
          %s214 = scalar_lea.vmem [#allocation2], %s213
          %s215 = smul.u32 4, %s31
          %s217 = ssub.s32 512, 512
          %218 = vsyncadd %s211, %s217
          %s219 = sadd.s32 %s32, %s215
          %s220 = smul.addr %s30, 4
          %s221 = sadd.s32 %s219, %s220
          %s222 = smul.addr %s221, 128
          %s223 = scalar_lea.hbm %s0, %s222
          %s224 = sshll.u32 %s214, 4
          %s225 = int_to_ptr.vmem [resolvable:$true] %s224
          %230 = dma.hbm_to_vmem [thread:$0]  %s223, 512, %s225, %s211, 128, 128, 8
        $region20: #{tpu_custom_call.1} parent=15 // pred_fallthru
          _
        // Predicated region
        $region21: #{tpu_custom_call.1} parent=15 // pred_check
          %p231 = pneg %p94
        $region22: #{tpu_custom_call.1} parent=15 // pred_check_branch
          %233 = sbr.rel (%p231) target = $region24
        $region23: #{tpu_custom_call.1} parent=15 // pred_region
          %s234 = sand.u32 %s23, 1
          %s235 = scalar_lea.sflag [#allocation6], %s234
          %s236 = sand.u32 %s84, 1
          %s237 = smul.addr %s236, 32
          %s238 = scalar_lea.vmem [#allocation5], %s237
          %s239 = smul.u32 4, %s31
          %s241 = ssub.s32 512, 512
          %242 = vsyncadd %s235, %s241
          %s243 = smul.addr %s30, 4
          %s244 = sadd.s32 %s239, %s243
          %s245 = smul.addr %s244, 128
          %s246 = scalar_lea.hbm %s1, %s245
          %s247 = sshll.u32 %s238, 4
          %s248 = int_to_ptr.vmem [resolvable:$true] %s247
          %253 = dma.hbm_to_vmem [thread:$0]  %s246, 512, %s248, %s235, 128, 128, 8
        $region24: #{tpu_custom_call.1} parent=15 // pred_fallthru
          _
        // Predicated region
        $region25: #{tpu_custom_call.1} parent=15 // pred_check
          %p254 = pneg %p122
        $region26: #{tpu_custom_call.1} parent=15 // pred_check_branch
          %256 = sbr.rel (%p254) target = $region28
        $region27: #{tpu_custom_call.1} parent=15 // pred_region
          %s257 = sand.u32 %s23, 1
          %s258 = scalar_lea.sflag [#allocation6], %s257
          %s259 = sand.u32 %s112, 1
          %s260 = smul.addr %s259, 32
          %s261 = scalar_lea.vmem [#allocation7], %s260
          %s262 = smul.u32 4, %s31
          %s264 = ssub.s32 512, 512
          %265 = vsyncadd %s258, %s264
          %s266 = smul.addr %s30, 4
          %s267 = sadd.s32 %s262, %s266
          %s268 = smul.addr %s267, 128
          %s269 = scalar_lea.hbm %s2, %s268
          %s270 = sshll.u32 %s261, 4
          %s271 = int_to_ptr.vmem [resolvable:$true] %s270
          %276 = dma.hbm_to_vmem [thread:$0]  %s269, 512, %s271, %s258, 128, 128, 8
        $region28: #{tpu_custom_call.1} parent=15 // pred_fallthru
          _
      $region16: #{tpu_custom_call.1} parent=5 // pred_fallthru
        _
      %p277 = scmp.le.s32.totalorder 1, %s23
      %p278 = scmp.lt.s32.totalorder %s23, 3
      %p279 = pnand %p277, %p278
      %p280 = pneg %p279
      // Predicated region
      $region29: #{tpu_custom_call.1} parent=5 // pred_check
        _
      $region30: #{tpu_custom_call.1} parent=5 // pred_check_branch
        %282 = sbr.rel (%p279) target = $region32
      $region31: #{tpu_custom_call.1} parent=5 // pred_region
        %s283 = ssub.s32 %s23, 1
        %s284 = sand.u32 %s59, 1
        %s285 = scalar_lea.sflag [#allocation3], %s284
        %s286 = sand.u32 %s59, 1
        %s287 = smul.addr %s286, 32
        %s288 = scalar_lea.vmem [#allocation2], %s287
        // Predicated region
        $region33: #{tpu_custom_call.1} parent=31 // pred_check
          %p289 = pneg %p72
        $region34: #{tpu_custom_call.1} parent=31 // pred_check_branch
          %291 = sbr.rel (%p289) target = $region36
        $region35: #{tpu_custom_call.1} parent=31 // pred_region
          %292 = dma.done %s285, 512
        $region36: #{tpu_custom_call.1} parent=31 // pred_fallthru
          _
        %s293 = sand.u32 %s28, 1
        %s294 = scalar_lea.sflag [#allocation6], %s293
        %s295 = sand.u32 %s87, 1
        %s296 = smul.addr %s295, 32
        %s297 = scalar_lea.vmem [#allocation5], %s296
        // Predicated region
        $region37: #{tpu_custom_call.1} parent=31 // pred_check
          %p298 = pneg %p100
        $region38: #{tpu_custom_call.1} parent=31 // pred_check_branch
          %300 = sbr.rel (%p298) target = $region40
        $region39: #{tpu_custom_call.1} parent=31 // pred_region
          %301 = dma.done %s294, 512
        $region40: #{tpu_custom_call.1} parent=31 // pred_fallthru
          _
        %s302 = sand.u32 %s28, 1
        %s303 = scalar_lea.sflag [#allocation6], %s302
        %s304 = sand.u32 %s115, 1
        %s305 = smul.addr %s304, 32
        %s306 = scalar_lea.vmem [#allocation7], %s305
        // Predicated region
        $region41: #{tpu_custom_call.1} parent=31 // pred_check
          %p307 = pneg %p128
        $region42: #{tpu_custom_call.1} parent=31 // pred_check_branch
          %309 = sbr.rel (%p307) target = $region44
        $region43: #{tpu_custom_call.1} parent=31 // pred_region
          %310 = dma.done %s303, 512
        $region44: #{tpu_custom_call.1} parent=31 // pred_fallthru
          _
        %s311 = sand.u32 %s59, 1
        %s312 = scalar_lea.sflag [#allocation3], %s311
        %s313 = sand.u32 %s59, 1
        %s314 = smul.addr %s313, 32
        %s315 = scalar_lea.vmem [#allocation2], %s314
        %p316 = pneg %p72
        %p317 = pneg %p69
        %s318 = sand.u32 %s28, 1
        %s319 = scalar_lea.sflag [#allocation6], %s318
        %s320 = sand.u32 %s87, 1
        %s321 = smul.addr %s320, 32
        %s322 = scalar_lea.vmem [#allocation5], %s321
        %p323 = pneg %p100
        %p324 = pneg %p97
        %s325 = sand.u32 %s28, 1
        %s326 = scalar_lea.sflag [#allocation6], %s325
        %s327 = sand.u32 %s115, 1
        %s328 = smul.addr %s327, 32
        %s329 = scalar_lea.vmem [#allocation7], %s328
        %p330 = pneg %p128
        %p331 = pneg %p125
        %p332 = pneg %p158
        %p333 = pneg %p155
        %s334 = sand.u32 %s145, 1
        %s335 = scalar_lea.sflag [#allocation4], %s334
        %s336 = sand.u32 %s145, 1
        %s337 = smul.addr %s336, 32
        %s338 = scalar_lea.vmem [#allocation8], %s337
        %p339 = pneg %p188
        %p340 = pneg %p185
        %s341 = sand.u32 %s175, 1
        %s342 = scalar_lea.sflag [#allocation10], %s341
        %s343 = sand.u32 %s175, 1
        %s344 = smul.addr %s343, 32
        %s345 = scalar_lea.vmem [#allocation9], %s344
        %s346 = smul.u32 4, %s34
        %s347 = smul.u32 4, %s34
        %s348 = smul.u32 4, %s34
        %s349 = smul.u32 4, %s34
        %s350 = smul.u32 4, %s34
        %v351 = vld [vmem:[%s288] sm:$0xff]
        %v352 = vld [vmem:[%s288 + $0x8] sm:$0xff]
        %v353 = vld [vmem:[%s288 + $0x10] sm:$0xff]
        %v354 = vld [vmem:[%s288 + $0x18] sm:$0xff]
        %v355 = vld [vmem:[%s297] sm:$0xff]
        %v356 = vld [vmem:[%s297 + $0x8] sm:$0xff]
        %v357 = vld [vmem:[%s297 + $0x10] sm:$0xff]
        %v358 = vld [vmem:[%s297 + $0x18] sm:$0xff]
        %v359 = vld [vmem:[%s306] sm:$0xff]
        %v360 = vld [vmem:[%s306 + $0x8] sm:$0xff]
        %v361 = vld [vmem:[%s306 + $0x10] sm:$0xff]
        %v362 = vld [vmem:[%s306 + $0x18] sm:$0xff]
        %v363 = vmul.f32 %v351, 0.17677669
        %v364 = vmul.f32 %v352, 0.17677669
        %v365 = vmul.f32 %v353, 0.17677669
        %v366 = vmul.f32 %v354, 0.17677669
        %vm367 = vcmask 261120
        %v369 = vsel %vm367, %v363, 0
        %v372 = vsel %vm367, %v355, 0
        %374 = vmatprep.subr.mxu0 0.0
        %375 = vmatpush1.xpose.msra.mxu0 %v372
        %376 = vmatprep.subr.mxu0 0.0
        %377 = vmatpush1.xpose.msra.mxu0 0.0
        %378 = vmatprep.subr.mxu0 0.0
        %379 = vmatpush1.xpose.msra.mxu0 0.0
        %380 = vmatprep.subr.mxu0 0.0
        %381 = vmatpush1.xpose.msra.mxu0 0.0
        %382 = vmatprep.subr.mxu0 0.0
        %383 = vmatpush1.xpose.msra.mxu0 0.0
        %384 = vmatprep.subr.mxu0 0.0
        %385 = vmatpush1.xpose.msra.mxu0 0.0
        %386 = vmatprep.subr.mxu0 0.0
        %387 = vmatpush1.xpose.msra.mxu0 0.0
        %388 = vmatprep.subr.mxu0 0.0
        %389 = vmatpush1.xpose.msra.mxu0 0.0
        %390 = vmatprep.subr.mxu0 0.0
        %391 = vmatpush1.xpose.msra.mxu0 0.0
        %392 = vmatprep.subr.mxu0 0.0
        %393 = vmatpush1.xpose.msra.mxu0 0.0
        %394 = vmatprep.subr.mxu0 0.0
        %395 = vmatpush1.xpose.msra.mxu0 0.0
        %396 = vmatprep.subr.mxu0 0.0
        %397 = vmatpush1.xpose.msra.mxu0 0.0
        %398 = vmatprep.subr.mxu0 0.0
        %399 = vmatpush1.xpose.msra.mxu0 0.0
        %400 = vmatprep.subr.mxu0 0.0
        %401 = vmatpush1.xpose.msra.mxu0 0.0
        %402 = vmatprep.subr.mxu0 0.0
        %403 = vmatpush1.xpose.msra.mxu0 0.0
        %404 = vmatprep.subr.mxu0 0.0
        %405 = vmatpush1.xpose.msra.mxu0 0.0
        %406 = vmatprep.subr.mxu0 0.0
        %407 = vmatpush1.xpose.msra.mxu0 0.0
        %408 = vmatprep.subr.mxu0 0.0
        %409 = vmatpush1.xpose.msra.mxu0 0.0
        %410 = vmatprep.subr.mxu0 0.0
        %411 = vmatpush1.xpose.msra.mxu0 0.0
        %412 = vmatprep.subr.mxu0 0.0
        %413 = vmatpush1.xpose.msra.mxu0 0.0
        %414 = vmatprep.subr.mxu0 0.0
        %415 = vmatpush1.xpose.msra.mxu0 0.0
        %416 = vmatprep.subr.mxu0 0.0
        %417 = vmatpush1.xpose.msra.mxu0 0.0
        %418 = vmatprep.subr.mxu0 0.0
        %419 = vmatpush1.xpose.msra.mxu0 0.0
        %420 = vmatprep.subr.mxu0 0.0
        %421 = vmatpush1.xpose.msra.mxu0 0.0
        %422 = vmatprep.subr.mxu0 0.0
        %423 = vmatpush1.xpose.msra.mxu0 0.0
        %424 = vmatprep.subr.mxu0 0.0
        %425 = vmatpush1.xpose.msra.mxu0 0.0
        %426 = vmatprep.subr.mxu0 0.0
        %427 = vmatpush1.xpose.msra.mxu0 0.0
        %428 = vmatprep.subr.mxu0 0.0
        %429 = vmatpush1.xpose.msra.mxu0 0.0
        %430 = vmatprep.subr.mxu0 0.0
        %431 = vmatpush1.xpose.msra.mxu0 0.0
        %432 = vmatprep.subr.mxu0 0.0
        %433 = vmatpush1.xpose.msra.mxu0 0.0
        %434 = vmatprep.subr.mxu0 0.0
        %435 = vmatpush1.xpose.msra.mxu0 0.0
        %436 = vmatprep.subr.mxu0 0.0
        %437 = vmatpush1.xpose.msra.mxu0 0.0
        %438 = vmatprep.mubr.f32.mxu0 0.0
        %439 = vmatmul.mubr.f32.gmra.mrb[0].mxu0 %v369
        %v440 = vpop.f32.mrb[0].mxu0
        %v441 = vadd.f32 0.0, %v440
        %v442 = vpop.f32.mrb[0].mxu0
        %443 = vdwg.mxu0
        %v445 = vsel %vm367, %v364, 0
        %v448 = vsel %vm367, %v356, 0
        %450 = vmatprep.subr.mxu0 0.0
        %451 = vmatpush1.xpose.msra.mxu0 %v448
        %452 = vmatprep.subr.mxu0 0.0
        %453 = vmatpush1.xpose.msra.mxu0 0.0
        %454 = vmatprep.subr.mxu0 0.0
        %455 = vmatpush1.xpose.msra.mxu0 0.0
        %456 = vmatprep.subr.mxu0 0.0
        %457 = vmatpush1.xpose.msra.mxu0 0.0
        %458 = vmatprep.subr.mxu0 0.0
        %459 = vmatpush1.xpose.msra.mxu0 0.0
        %460 = vmatprep.subr.mxu0 0.0
        %461 = vmatpush1.xpose.msra.mxu0 0.0
        %462 = vmatprep.subr.mxu0 0.0
        %463 = vmatpush1.xpose.msra.mxu0 0.0
        %464 = vmatprep.subr.mxu0 0.0
        %465 = vmatpush1.xpose.msra.mxu0 0.0
        %466 = vmatprep.subr.mxu0 0.0
        %467 = vmatpush1.xpose.msra.mxu0 0.0
        %468 = vmatprep.subr.mxu0 0.0
        %469 = vmatpush1.xpose.msra.mxu0 0.0
        %470 = vmatprep.subr.mxu0 0.0
        %471 = vmatpush1.xpose.msra.mxu0 0.0
        %472 = vmatprep.subr.mxu0 0.0
        %473 = vmatpush1.xpose.msra.mxu0 0.0
        %474 = vmatprep.subr.mxu0 0.0
        %475 = vmatpush1.xpose.msra.mxu0 0.0
        %476 = vmatprep.subr.mxu0 0.0
        %477 = vmatpush1.xpose.msra.mxu0 0.0
        %478 = vmatprep.subr.mxu0 0.0
        %479 = vmatpush1.xpose.msra.mxu0 0.0
        %480 = vmatprep.subr.mxu0 0.0
        %481 = vmatpush1.xpose.msra.mxu0 0.0
        %482 = vmatprep.subr.mxu0 0.0
        %483 = vmatpush1.xpose.msra.mxu0 0.0
        %484 = vmatprep.subr.mxu0 0.0
        %485 = vmatpush1.xpose.msra.mxu0 0.0
        %486 = vmatprep.subr.mxu0 0.0
        %487 = vmatpush1.xpose.msra.mxu0 0.0
        %488 = vmatprep.subr.mxu0 0.0
        %489 = vmatpush1.xpose.msra.mxu0 0.0
        %490 = vmatprep.subr.mxu0 0.0
        %491 = vmatpush1.xpose.msra.mxu0 0.0
        %492 = vmatprep.subr.mxu0 0.0
        %493 = vmatpush1.xpose.msra.mxu0 0.0
        %494 = vmatprep.subr.mxu0 0.0
        %495 = vmatpush1.xpose.msra.mxu0 0.0
        %496 = vmatprep.subr.mxu0 0.0
        %497 = vmatpush1.xpose.msra.mxu0 0.0
        %498 = vmatprep.subr.mxu0 0.0
        %499 = vmatpush1.xpose.msra.mxu0 0.0
        %500 = vmatprep.subr.mxu0 0.0
        %501 = vmatpush1.xpose.msra.mxu0 0.0
        %502 = vmatprep.subr.mxu0 0.0
        %503 = vmatpush1.xpose.msra.mxu0 0.0
        %504 = vmatprep.subr.mxu0 0.0
        %505 = vmatpush1.xpose.msra.mxu0 0.0
        %506 = vmatprep.subr.mxu0 0.0
        %507 = vmatpush1.xpose.msra.mxu0 0.0
        %508 = vmatprep.subr.mxu0 0.0
        %509 = vmatpush1.xpose.msra.mxu0 0.0
        %510 = vmatprep.subr.mxu0 0.0
        %511 = vmatpush1.xpose.msra.mxu0 0.0
        %512 = vmatprep.subr.mxu0 0.0
        %513 = vmatpush1.xpose.msra.mxu0 0.0
        %514 = vmatprep.mubr.f32.mxu0 0.0
        %515 = vmatmul.mubr.f32.gmra.mrb[0].mxu0 %v445
        %v516 = vpop.f32.mrb[0].mxu0
        %v517 = vadd.f32 0.0, %v516
        %v518 = vpop.f32.mrb[0].mxu0
        %519 = vdwg.mxu0
        %v521 = vsel %vm367, %v365, 0
        %v524 = vsel %vm367, %v357, 0
        %526 = vmatprep.subr.mxu0 0.0
        %527 = vmatpush1.xpose.msra.mxu0 %v524
        %528 = vmatprep.subr.mxu0 0.0
        %529 = vmatpush1.xpose.msra.mxu0 0.0
        %530 = vmatprep.subr.mxu0 0.0
        %531 = vmatpush1.xpose.msra.mxu0 0.0
        %532 = vmatprep.subr.mxu0 0.0
        %533 = vmatpush1.xpose.msra.mxu0 0.0
        %534 = vmatprep.subr.mxu0 0.0
        %535 = vmatpush1.xpose.msra.mxu0 0.0
        %536 = vmatprep.subr.mxu0 0.0
        %537 = vmatpush1.xpose.msra.mxu0 0.0
        %538 = vmatprep.subr.mxu0 0.0
        %539 = vmatpush1.xpose.msra.mxu0 0.0
        %540 = vmatprep.subr.mxu0 0.0
        %541 = vmatpush1.xpose.msra.mxu0 0.0
        %542 = vmatprep.subr.mxu0 0.0
        %543 = vmatpush1.xpose.msra.mxu0 0.0
        %544 = vmatprep.subr.mxu0 0.0
        %545 = vmatpush1.xpose.msra.mxu0 0.0
        %546 = vmatprep.subr.mxu0 0.0
        %547 = vmatpush1.xpose.msra.mxu0 0.0
        %548 = vmatprep.subr.mxu0 0.0
        %549 = vmatpush1.xpose.msra.mxu0 0.0
        %550 = vmatprep.subr.mxu0 0.0
        %551 = vmatpush1.xpose.msra.mxu0 0.0
        %552 = vmatprep.subr.mxu0 0.0
        %553 = vmatpush1.xpose.msra.mxu0 0.0
        %554 = vmatprep.subr.mxu0 0.0
        %555 = vmatpush1.xpose.msra.mxu0 0.0
        %556 = vmatprep.subr.mxu0 0.0
        %557 = vmatpush1.xpose.msra.mxu0 0.0
        %558 = vmatprep.subr.mxu0 0.0
        %559 = vmatpush1.xpose.msra.mxu0 0.0
        %560 = vmatprep.subr.mxu0 0.0
        %561 = vmatpush1.xpose.msra.mxu0 0.0
        %562 = vmatprep.subr.mxu0 0.0
        %563 = vmatpush1.xpose.msra.mxu0 0.0
        %564 = vmatprep.subr.mxu0 0.0
        %565 = vmatpush1.xpose.msra.mxu0 0.0
        %566 = vmatprep.subr.mxu0 0.0
        %567 = vmatpush1.xpose.msra.mxu0 0.0
        %568 = vmatprep.subr.mxu0 0.0
        %569 = vmatpush1.xpose.msra.mxu0 0.0
        %570 = vmatprep.subr.mxu0 0.0
        %571 = vmatpush1.xpose.msra.mxu0 0.0
        %572 = vmatprep.subr.mxu0 0.0
        %573 = vmatpush1.xpose.msra.mxu0 0.0
        %574 = vmatprep.subr.mxu0 0.0
        %575 = vmatpush1.xpose.msra.mxu0 0.0
        %576 = vmatprep.subr.mxu0 0.0
        %577 = vmatpush1.xpose.msra.mxu0 0.0
        %578 = vmatprep.subr.mxu0 0.0
        %579 = vmatpush1.xpose.msra.mxu0 0.0
        %580 = vmatprep.subr.mxu0 0.0
        %581 = vmatpush1.xpose.msra.mxu0 0.0
        %582 = vmatprep.subr.mxu0 0.0
        %583 = vmatpush1.xpose.msra.mxu0 0.0
        %584 = vmatprep.subr.mxu0 0.0
        %585 = vmatpush1.xpose.msra.mxu0 0.0
        %586 = vmatprep.subr.mxu0 0.0
        %587 = vmatpush1.xpose.msra.mxu0 0.0
        %588 = vmatprep.subr.mxu0 0.0
        %589 = vmatpush1.xpose.msra.mxu0 0.0
        %590 = vmatprep.mubr.f32.mxu0 0.0
        %591 = vmatmul.mubr.f32.gmra.mrb[0].mxu0 %v521
        %v592 = vpop.f32.mrb[0].mxu0
        %v593 = vadd.f32 0.0, %v592
        %v594 = vpop.f32.mrb[0].mxu0
        %595 = vdwg.mxu0
        %v597 = vsel %vm367, %v366, 0
        %v600 = vsel %vm367, %v358, 0
        %602 = vmatprep.subr.mxu0 0.0
        %603 = vmatpush1.xpose.msra.mxu0 %v600
        %604 = vmatprep.subr.mxu0 0.0
        %605 = vmatpush1.xpose.msra.mxu0 0.0
        %606 = vmatprep.subr.mxu0 0.0
        %607 = vmatpush1.xpose.msra.mxu0 0.0
        %608 = vmatprep.subr.mxu0 0.0
        %609 = vmatpush1.xpose.msra.mxu0 0.0
        %610 = vmatprep.subr.mxu0 0.0
        %611 = vmatpush1.xpose.msra.mxu0 0.0
        %612 = vmatprep.subr.mxu0 0.0
        %613 = vmatpush1.xpose.msra.mxu0 0.0
        %614 = vmatprep.subr.mxu0 0.0
        %615 = vmatpush1.xpose.msra.mxu0 0.0
        %616 = vmatprep.subr.mxu0 0.0
        %617 = vmatpush1.xpose.msra.mxu0 0.0
        %618 = vmatprep.subr.mxu0 0.0
        %619 = vmatpush1.xpose.msra.mxu0 0.0
        %620 = vmatprep.subr.mxu0 0.0
        %621 = vmatpush1.xpose.msra.mxu0 0.0
        %622 = vmatprep.subr.mxu0 0.0
        %623 = vmatpush1.xpose.msra.mxu0 0.0
        %624 = vmatprep.subr.mxu0 0.0
        %625 = vmatpush1.xpose.msra.mxu0 0.0
        %626 = vmatprep.subr.mxu0 0.0
        %627 = vmatpush1.xpose.msra.mxu0 0.0
        %628 = vmatprep.subr.mxu0 0.0
        %629 = vmatpush1.xpose.msra.mxu0 0.0
        %630 = vmatprep.subr.mxu0 0.0
        %631 = vmatpush1.xpose.msra.mxu0 0.0
        %632 = vmatprep.subr.mxu0 0.0
        %633 = vmatpush1.xpose.msra.mxu0 0.0
        %634 = vmatprep.subr.mxu0 0.0
        %635 = vmatpush1.xpose.msra.mxu0 0.0
        %636 = vmatprep.subr.mxu0 0.0
        %637 = vmatpush1.xpose.msra.mxu0 0.0
        %638 = vmatprep.subr.mxu0 0.0
        %639 = vmatpush1.xpose.msra.mxu0 0.0
        %640 = vmatprep.subr.mxu0 0.0
        %641 = vmatpush1.xpose.msra.mxu0 0.0
        %642 = vmatprep.subr.mxu0 0.0
        %643 = vmatpush1.xpose.msra.mxu0 0.0
        %644 = vmatprep.subr.mxu0 0.0
        %645 = vmatpush1.xpose.msra.mxu0 0.0
        %646 = vmatprep.subr.mxu0 0.0
        %647 = vmatpush1.xpose.msra.mxu0 0.0
        %648 = vmatprep.subr.mxu0 0.0
        %649 = vmatpush1.xpose.msra.mxu0 0.0
        %650 = vmatprep.subr.mxu0 0.0
        %651 = vmatpush1.xpose.msra.mxu0 0.0
        %652 = vmatprep.subr.mxu0 0.0
        %653 = vmatpush1.xpose.msra.mxu0 0.0
        %654 = vmatprep.subr.mxu0 0.0
        %655 = vmatpush1.xpose.msra.mxu0 0.0
        %656 = vmatprep.subr.mxu0 0.0
        %657 = vmatpush1.xpose.msra.mxu0 0.0
        %658 = vmatprep.subr.mxu0 0.0
        %659 = vmatpush1.xpose.msra.mxu0 0.0
        %660 = vmatprep.subr.mxu0 0.0
        %661 = vmatpush1.xpose.msra.mxu0 0.0
        %662 = vmatprep.subr.mxu0 0.0
        %663 = vmatpush1.xpose.msra.mxu0 0.0
        %664 = vmatprep.subr.mxu0 0.0
        %665 = vmatpush1.xpose.msra.mxu0 0.0
        %666 = vmatprep.mubr.f32.mxu0 0.0
        %667 = vmatmul.mubr.f32.gmra.mrb[0].mxu0 %v597
        %v668 = vpop.f32.mrb[0].mxu0
        %v669 = vadd.f32 0.0, %v668
        %v670 = vpop.f32.mrb[0].mxu0
        %671 = vdwg.mxu0
        %vm672 = vcmask 64512
        %v673 = vsel %vm672, %v441, -inf
        %674 = vmax.xlane.f32.xlu0 %v673
        %v675 = vpop.xlane.xlu0 %674
        %v676 = vsel %vm672, %v517, -inf
        %677 = vmax.xlane.f32.xlu0 %v676
        %v678 = vpop.xlane.xlu0 %677
        %v679 = vsel %vm672, %v593, -inf
        %680 = vmax.xlane.f32.xlu0 %v679
        %v681 = vpop.xlane.xlu0 %680
        %v682 = vsel %vm672, %v669, -inf
        %683 = vmax.xlane.f32.xlu0 %v682
        %v684 = vpop.xlane.xlu0 %683
        %v685 = vsub.f32 %v441, %v675
        %v686 = vsub.f32 %v517, %v678
        %v687 = vsub.f32 %v593, %v681
        %v688 = vsub.f32 %v669, %v684
        %v689 = vmul.f32 %v685, 1.442695
        %v690 = vpow.pop %v689
        %v691 = vmul.f32 %v686, 1.442695
        %v692 = vpow.pop %v691
        %v693 = vmul.f32 %v687, 1.442695
        %v694 = vpow.pop %v693
        %v695 = vmul.f32 %v688, 1.442695
        %v696 = vpow.pop %v695
        %v697 = vsel %vm672, %v690, 0.0
        %698 = vadd.xlane.f32.xlu0 %v697
        %v699 = vpop.xlane.xlu0 %698
        %v700 = vsel %vm672, %v692, 0.0
        %701 = vadd.xlane.f32.xlu0 %v700
        %v702 = vpop.xlane.xlu0 %701
        %v703 = vsel %vm672, %v694, 0.0
        %704 = vadd.xlane.f32.xlu0 %v703
        %v705 = vpop.xlane.xlu0 %704
        %v706 = vsel %vm672, %v696, 0.0
        %707 = vadd.xlane.f32.xlu0 %v706
        %v708 = vpop.xlane.xlu0 %707
        %v709 = vrcp.pop %v699
        %v710 = vrcp.pop %v702
        %v711 = vrcp.pop %v705
        %v712 = vrcp.pop %v708
        %v713 = vmul.f32 %v690, %v709
        %v714 = vmul.f32 %v692, %v710
        %v715 = vmul.f32 %v694, %v711
        %v716 = vmul.f32 %v696, %v712
        %717 = vst.msk [vmem:[%s345] sm:$0xff] %vm672, %v713
        %718 = vst.msk [vmem:[%s345 + $0x8] sm:$0xff] %vm672, %v714
        %719 = vst.msk [vmem:[%s345 + $0x10] sm:$0xff] %vm672, %v715
        %720 = vst.msk [vmem:[%s345 + $0x18] sm:$0xff] %vm672, %v716
        %v722 = vsel %vm672, %v713, 0
        %724 = vmatprep.subr.mxu0 0.0
        %725 = vmatpush1.msra.mxu0 %v359
        %726 = vmatprep.subr.mxu0 0.0
        %727 = vmatpush1.msra.mxu0 0.0
        %728 = vmatprep.subr.mxu0 0.0
        %729 = vmatpush1.msra.mxu0 0.0
        %730 = vmatprep.subr.mxu0 0.0
        %731 = vmatpush1.msra.mxu0 0.0
        %732 = vmatprep.subr.mxu0 0.0
        %733 = vmatpush1.msra.mxu0 0.0
        %734 = vmatprep.subr.mxu0 0.0
        %735 = vmatpush1.msra.mxu0 0.0
        %736 = vmatprep.subr.mxu0 0.0
        %737 = vmatpush1.msra.mxu0 0.0
        %738 = vmatprep.subr.mxu0 0.0
        %739 = vmatpush1.msra.mxu0 0.0
        %740 = vmatprep.subr.mxu0 0.0
        %741 = vmatpush1.msra.mxu0 0.0
        %742 = vmatprep.subr.mxu0 0.0
        %743 = vmatpush1.msra.mxu0 0.0
        %744 = vmatprep.subr.mxu0 0.0
        %745 = vmatpush1.msra.mxu0 0.0
        %746 = vmatprep.subr.mxu0 0.0
        %747 = vmatpush1.msra.mxu0 0.0
        %748 = vmatprep.subr.mxu0 0.0
        %749 = vmatpush1.msra.mxu0 0.0
        %750 = vmatprep.subr.mxu0 0.0
        %751 = vmatpush1.msra.mxu0 0.0
        %752 = vmatprep.subr.mxu0 0.0
        %753 = vmatpush1.msra.mxu0 0.0
        %754 = vmatprep.subr.mxu0 0.0
        %755 = vmatpush1.msra.mxu0 0.0
        %756 = vmatprep.subr.mxu0 0.0
        %757 = vmatpush1.msra.mxu0 0.0
        %758 = vmatprep.subr.mxu0 0.0
        %759 = vmatpush1.msra.mxu0 0.0
        %760 = vmatprep.subr.mxu0 0.0
        %761 = vmatpush1.msra.mxu0 0.0
        %762 = vmatprep.subr.mxu0 0.0
        %763 = vmatpush1.msra.mxu0 0.0
        %764 = vmatprep.subr.mxu0 0.0
        %765 = vmatpush1.msra.mxu0 0.0
        %766 = vmatprep.subr.mxu0 0.0
        %767 = vmatpush1.msra.mxu0 0.0
        %768 = vmatprep.subr.mxu0 0.0
        %769 = vmatpush1.msra.mxu0 0.0
        %770 = vmatprep.subr.mxu0 0.0
        %771 = vmatpush1.msra.mxu0 0.0
        %772 = vmatprep.subr.mxu0 0.0
        %773 = vmatpush1.msra.mxu0 0.0
        %774 = vmatprep.subr.mxu0 0.0
        %775 = vmatpush1.msra.mxu0 0.0
        %776 = vmatprep.subr.mxu0 0.0
        %777 = vmatpush1.msra.mxu0 0.0
        %778 = vmatprep.subr.mxu0 0.0
        %779 = vmatpush1.msra.mxu0 0.0
        %780 = vmatprep.subr.mxu0 0.0
        %781 = vmatpush1.msra.mxu0 0.0
        %782 = vmatprep.subr.mxu0 0.0
        %783 = vmatpush1.msra.mxu0 0.0
        %784 = vmatprep.subr.mxu0 0.0
        %785 = vmatpush1.msra.mxu0 0.0
        %786 = vmatprep.subr.mxu0 0.0
        %787 = vmatpush1.msra.mxu0 0.0
        %788 = vmatprep.mubr.f32.mxu0 0.0
        %789 = vmatmul.mubr.f32.gmra.mrb[0].mxu0 %v722
        %v790 = vpop.f32.mrb[0].mxu0
        %v791 = vadd.f32 0.0, %v790
        %v792 = vpop.f32.mrb[0].mxu0
        %793 = vdwg.mxu0
        %v795 = vsel %vm672, %v714, 0
        %797 = vmatprep.subr.mxu0 0.0
        %798 = vmatpush1.msra.mxu0 %v360
        %799 = vmatprep.subr.mxu0 0.0
        %800 = vmatpush1.msra.mxu0 0.0
        %801 = vmatprep.subr.mxu0 0.0
        %802 = vmatpush1.msra.mxu0 0.0
        %803 = vmatprep.subr.mxu0 0.0
        %804 = vmatpush1.msra.mxu0 0.0
        %805 = vmatprep.subr.mxu0 0.0
        %806 = vmatpush1.msra.mxu0 0.0
        %807 = vmatprep.subr.mxu0 0.0
        %808 = vmatpush1.msra.mxu0 0.0
        %809 = vmatprep.subr.mxu0 0.0
        %810 = vmatpush1.msra.mxu0 0.0
        %811 = vmatprep.subr.mxu0 0.0
        %812 = vmatpush1.msra.mxu0 0.0
        %813 = vmatprep.subr.mxu0 0.0
        %814 = vmatpush1.msra.mxu0 0.0
        %815 = vmatprep.subr.mxu0 0.0
        %816 = vmatpush1.msra.mxu0 0.0
        %817 = vmatprep.subr.mxu0 0.0
        %818 = vmatpush1.msra.mxu0 0.0
        %819 = vmatprep.subr.mxu0 0.0
        %820 = vmatpush1.msra.mxu0 0.0
        %821 = vmatprep.subr.mxu0 0.0
        %822 = vmatpush1.msra.mxu0 0.0
        %823 = vmatprep.subr.mxu0 0.0
        %824 = vmatpush1.msra.mxu0 0.0
        %825 = vmatprep.subr.mxu0 0.0
        %826 = vmatpush1.msra.mxu0 0.0
        %827 = vmatprep.subr.mxu0 0.0
        %828 = vmatpush1.msra.mxu0 0.0
        %829 = vmatprep.subr.mxu0 0.0
        %830 = vmatpush1.msra.mxu0 0.0
        %831 = vmatprep.subr.mxu0 0.0
        %832 = vmatpush1.msra.mxu0 0.0
        %833 = vmatprep.subr.mxu0 0.0
        %834 = vmatpush1.msra.mxu0 0.0
        %835 = vmatprep.subr.mxu0 0.0
        %836 = vmatpush1.msra.mxu0 0.0
        %837 = vmatprep.subr.mxu0 0.0
        %838 = vmatpush1.msra.mxu0 0.0
        %839 = vmatprep.subr.mxu0 0.0
        %840 = vmatpush1.msra.mxu0 0.0
        %841 = vmatprep.subr.mxu0 0.0
        %842 = vmatpush1.msra.mxu0 0.0
        %843 = vmatprep.subr.mxu0 0.0
        %844 = vmatpush1.msra.mxu0 0.0
        %845 = vmatprep.subr.mxu0 0.0
        %846 = vmatpush1.msra.mxu0 0.0
        %847 = vmatprep.subr.mxu0 0.0
        %848 = vmatpush1.msra.mxu0 0.0
        %849 = vmatprep.subr.mxu0 0.0
        %850 = vmatpush1.msra.mxu0 0.0
        %851 = vmatprep.subr.mxu0 0.0
        %852 = vmatpush1.msra.mxu0 0.0
        %853 = vmatprep.subr.mxu0 0.0
        %854 = vmatpush1.msra.mxu0 0.0
        %855 = vmatprep.subr.mxu0 0.0
        %856 = vmatpush1.msra.mxu0 0.0
        %857 = vmatprep.subr.mxu0 0.0
        %858 = vmatpush1.msra.mxu0 0.0
        %859 = vmatprep.subr.mxu0 0.0
        %860 = vmatpush1.msra.mxu0 0.0
        %861 = vmatprep.mubr.f32.mxu0 0.0
        %862 = vmatmul.mubr.f32.gmra.mrb[0].mxu0 %v795
        %v863 = vpop.f32.mrb[0].mxu0
        %v864 = vadd.f32 0.0, %v863
        %v865 = vpop.f32.mrb[0].mxu0
        %866 = vdwg.mxu0
        %v868 = vsel %vm672, %v715, 0
        %870 = vmatprep.subr.mxu0 0.0
        %871 = vmatpush1.msra.mxu0 %v361
        %872 = vmatprep.subr.mxu0 0.0
        %873 = vmatpush1.msra.mxu0 0.0
        %874 = vmatprep.subr.mxu0 0.0
        %875 = vmatpush1.msra.mxu0 0.0
        %876 = vmatprep.subr.mxu0 0.0
        %877 = vmatpush1.msra.mxu0 0.0
        %878 = vmatprep.subr.mxu0 0.0
        %879 = vmatpush1.msra.mxu0 0.0
        %880 = vmatprep.subr.mxu0 0.0
        %881 = vmatpush1.msra.mxu0 0.0
        %882 = vmatprep.subr.mxu0 0.0
        %883 = vmatpush1.msra.mxu0 0.0
        %884 = vmatprep.subr.mxu0 0.0
        %885 = vmatpush1.msra.mxu0 0.0
        %886 = vmatprep.subr.mxu0 0.0
        %887 = vmatpush1.msra.mxu0 0.0
        %888 = vmatprep.subr.mxu0 0.0
        %889 = vmatpush1.msra.mxu0 0.0
        %890 = vmatprep.subr.mxu0 0.0
        %891 = vmatpush1.msra.mxu0 0.0
        %892 = vmatprep.subr.mxu0 0.0
        %893 = vmatpush1.msra.mxu0 0.0
        %894 = vmatprep.subr.mxu0 0.0
        %895 = vmatpush1.msra.mxu0 0.0
        %896 = vmatprep.subr.mxu0 0.0
        %897 = vmatpush1.msra.mxu0 0.0
        %898 = vmatprep.subr.mxu0 0.0
        %899 = vmatpush1.msra.mxu0 0.0
        %900 = vmatprep.subr.mxu0 0.0
        %901 = vmatpush1.msra.mxu0 0.0
        %902 = vmatprep.subr.mxu0 0.0
        %903 = vmatpush1.msra.mxu0 0.0
        %904 = vmatprep.subr.mxu0 0.0
        %905 = vmatpush1.msra.mxu0 0.0
        %906 = vmatprep.subr.mxu0 0.0
        %907 = vmatpush1.msra.mxu0 0.0
        %908 = vmatprep.subr.mxu0 0.0
        %909 = vmatpush1.msra.mxu0 0.0
        %910 = vmatprep.subr.mxu0 0.0
        %911 = vmatpush1.msra.mxu0 0.0
        %912 = vmatprep.subr.mxu0 0.0
        %913 = vmatpush1.msra.mxu0 0.0
        %914 = vmatprep.subr.mxu0 0.0
        %915 = vmatpush1.msra.mxu0 0.0
        %916 = vmatprep.subr.mxu0 0.0
        %917 = vmatpush1.msra.mxu0 0.0
        %918 = vmatprep.subr.mxu0 0.0
        %919 = vmatpush1.msra.mxu0 0.0
        %920 = vmatprep.subr.mxu0 0.0
        %921 = vmatpush1.msra.mxu0 0.0
        %922 = vmatprep.subr.mxu0 0.0
        %923 = vmatpush1.msra.mxu0 0.0
        %924 = vmatprep.subr.mxu0 0.0
        %925 = vmatpush1.msra.mxu0 0.0
        %926 = vmatprep.subr.mxu0 0.0
        %927 = vmatpush1.msra.mxu0 0.0
        %928 = vmatprep.subr.mxu0 0.0
        %929 = vmatpush1.msra.mxu0 0.0
        %930 = vmatprep.subr.mxu0 0.0
        %931 = vmatpush1.msra.mxu0 0.0
        %932 = vmatprep.subr.mxu0 0.0
        %933 = vmatpush1.msra.mxu0 0.0
        %934 = vmatprep.mubr.f32.mxu0 0.0
        %935 = vmatmul.mubr.f32.gmra.mrb[0].mxu0 %v868
        %v936 = vpop.f32.mrb[0].mxu0
        %v937 = vadd.f32 0.0, %v936
        %v938 = vpop.f32.mrb[0].mxu0
        %939 = vdwg.mxu0
        %v941 = vsel %vm672, %v716, 0
        %943 = vmatprep.subr.mxu0 0.0
        %944 = vmatpush1.msra.mxu0 %v362
        %945 = vmatprep.subr.mxu0 0.0
        %946 = vmatpush1.msra.mxu0 0.0
        %947 = vmatprep.subr.mxu0 0.0
        %948 = vmatpush1.msra.mxu0 0.0
        %949 = vmatprep.subr.mxu0 0.0
        %950 = vmatpush1.msra.mxu0 0.0
        %951 = vmatprep.subr.mxu0 0.0
        %952 = vmatpush1.msra.mxu0 0.0
        %953 = vmatprep.subr.mxu0 0.0
        %954 = vmatpush1.msra.mxu0 0.0
        %955 = vmatprep.subr.mxu0 0.0
        %956 = vmatpush1.msra.mxu0 0.0
        %957 = vmatprep.subr.mxu0 0.0
        %958 = vmatpush1.msra.mxu0 0.0
        %959 = vmatprep.subr.mxu0 0.0
        %960 = vmatpush1.msra.mxu0 0.0
        %961 = vmatprep.subr.mxu0 0.0
        %962 = vmatpush1.msra.mxu0 0.0
        %963 = vmatprep.subr.mxu0 0.0
        %964 = vmatpush1.msra.mxu0 0.0
        %965 = vmatprep.subr.mxu0 0.0
        %966 = vmatpush1.msra.mxu0 0.0
        %967 = vmatprep.subr.mxu0 0.0
        %968 = vmatpush1.msra.mxu0 0.0
        %969 = vmatprep.subr.mxu0 0.0
        %970 = vmatpush1.msra.mxu0 0.0
        %971 = vmatprep.subr.mxu0 0.0
        %972 = vmatpush1.msra.mxu0 0.0
        %973 = vmatprep.subr.mxu0 0.0
        %974 = vmatpush1.msra.mxu0 0.0
        %975 = vmatprep.subr.mxu0 0.0
        %976 = vmatpush1.msra.mxu0 0.0
        %977 = vmatprep.subr.mxu0 0.0
        %978 = vmatpush1.msra.mxu0 0.0
        %979 = vmatprep.subr.mxu0 0.0
        %980 = vmatpush1.msra.mxu0 0.0
        %981 = vmatprep.subr.mxu0 0.0
        %982 = vmatpush1.msra.mxu0 0.0
        %983 = vmatprep.subr.mxu0 0.0
        %984 = vmatpush1.msra.mxu0 0.0
        %985 = vmatprep.subr.mxu0 0.0
        %986 = vmatpush1.msra.mxu0 0.0
        %987 = vmatprep.subr.mxu0 0.0
        %988 = vmatpush1.msra.mxu0 0.0
        %989 = vmatprep.subr.mxu0 0.0
        %990 = vmatpush1.msra.mxu0 0.0
        %991 = vmatprep.subr.mxu0 0.0
        %992 = vmatpush1.msra.mxu0 0.0
        %993 = vmatprep.subr.mxu0 0.0
        %994 = vmatpush1.msra.mxu0 0.0
        %995 = vmatprep.subr.mxu0 0.0
        %996 = vmatpush1.msra.mxu0 0.0
        %997 = vmatprep.subr.mxu0 0.0
        %998 = vmatpush1.msra.mxu0 0.0
        %999 = vmatprep.subr.mxu0 0.0
        %1000 = vmatpush1.msra.mxu0 0.0
        %1001 = vmatprep.subr.mxu0 0.0
        %1002 = vmatpush1.msra.mxu0 0.0
        %1003 = vmatprep.subr.mxu0 0.0
        %1004 = vmatpush1.msra.mxu0 0.0
        %1005 = vmatprep.subr.mxu0 0.0
        %1006 = vmatpush1.msra.mxu0 0.0
        %1007 = vmatprep.mubr.f32.mxu0 0.0
        %1008 = vmatmul.mubr.f32.gmra.mrb[0].mxu0 %v941
        %v1009 = vpop.f32.mrb[0].mxu0
        %v1010 = vadd.f32 0.0, %v1009
        %v1011 = vpop.f32.mrb[0].mxu0
        %1012 = vdwg.mxu0
        %1013 = vst.msk [vmem:[%s338] sm:$0xff] %vm367, %v791
        %1014 = vst.msk [vmem:[%s338 + $0x8] sm:$0xff] %vm367, %v864
        %1015 = vst.msk [vmem:[%s338 + $0x10] sm:$0xff] %vm367, %v937
        %1016 = vst.msk [vmem:[%s338 + $0x18] sm:$0xff] %vm367, %v1010
        %s1017 = sand.u32 %s145, 1
        %s1018 = scalar_lea.sflag [#allocation4], %s1017
        %s1019 = sand.u32 %s145, 1
        %s1020 = smul.addr %s1019, 32
        %s1021 = scalar_lea.vmem [#allocation8], %s1020
        %s1022 = sand.u32 %s175, 1
        %s1023 = scalar_lea.sflag [#allocation10], %s1022
        %s1024 = sand.u32 %s175, 1
        %s1025 = smul.addr %s1024, 32
        %s1026 = scalar_lea.vmem [#allocation9], %s1025
        // Predicated region
        $region45: #{tpu_custom_call.1} parent=31 // pred_check
          %p1027 = pneg %p155
        $region46: #{tpu_custom_call.1} parent=31 // pred_check_branch
          %1029 = sbr.rel (%p1027) target = $region48
        $region47: #{tpu_custom_call.1} parent=31 // pred_region
          %s1030 = smul.u32 4, %s34
          %s1032 = ssub.s32 512, 512
          %1033 = vsyncadd %s1018, %s1032
          %s1034 = sadd.s32 %s35, %s1030
          %s1035 = smul.addr %s33, 4
          %s1036 = sadd.s32 %s1034, %s1035
          %s1037 = smul.addr %s1036, 128
          %s1038 = scalar_lea.hbm %s3, %s1037
          %s1039 = sshll.u32 %s1021, 4
          %s1040 = int_to_ptr.vmem [resolvable:$true] %s1039
          %1045 = dma.vmem_to_hbm [thread:$0]  %s1040, 512, %s1038, %s1018, 128, 128, 8
        $region48: #{tpu_custom_call.1} parent=31 // pred_fallthru
          _
        // Predicated region
        $region49: #{tpu_custom_call.1} parent=31 // pred_check
          %p1046 = pneg %p185
        $region50: #{tpu_custom_call.1} parent=31 // pred_check_branch
          %1048 = sbr.rel (%p1046) target = $region52
        $region51: #{tpu_custom_call.1} parent=31 // pred_region
          %s1049 = smul.u32 4, %s34
          %s1051 = ssub.s32 512, 512
          %1052 = vsyncadd %s1023, %s1051
          %s1053 = sadd.s32 %s35, %s1049
          %s1054 = smul.addr %s33, 4
          %s1055 = sadd.s32 %s1053, %s1054
          %s1056 = smul.addr %s1055, 128
          %s1057 = scalar_lea.hbm %s4, %s1056
          %s1058 = sshll.u32 %s1026, 4
          %s1059 = int_to_ptr.vmem [resolvable:$true] %s1058
          %1064 = dma.vmem_to_hbm [thread:$0]  %s1059, 512, %s1057, %s1023, 128, 128, 8
        $region52: #{tpu_custom_call.1} parent=31 // pred_fallthru
          _
      $region32: #{tpu_custom_call.1} parent=5 // pred_fallthru
        _
      %p1065 = scmp.le.s32.totalorder 2, %s23
      // Predicated region
      $region53: #{tpu_custom_call.1} parent=5 // pred_check
        %p1066 = pneg %p1065
      $region54: #{tpu_custom_call.1} parent=5 // pred_check_branch
        %1068 = sbr.rel (%p1066) target = $region56
      $region55: #{tpu_custom_call.1} parent=5 // pred_region
        %s1069 = ssub.s32 %s23, 2
        // Predicated region
        $region57: #{tpu_custom_call.1} parent=55 // pred_check
          %p1070 = pneg %p161
        $region58: #{tpu_custom_call.1} parent=55 // pred_check_branch
          %1072 = sbr.rel (%p1070) target = $region60
        $region59: #{tpu_custom_call.1} parent=55 // pred_region
          %s1073 = sand.u32 %s146, 1
          %s1074 = scalar_lea.sflag [#allocation4], %s1073
          %s1075 = sand.u32 %s146, 1
          %s1076 = smul.addr %s1075, 32
          %s1077 = scalar_lea.vmem [#allocation8], %s1076
          %1078 = dma.done %s1074, 512
        $region60: #{tpu_custom_call.1} parent=55 // pred_fallthru
          _
        // Predicated region
        $region61: #{tpu_custom_call.1} parent=55 // pred_check
          %p1079 = pneg %p191
        $region62: #{tpu_custom_call.1} parent=55 // pred_check_branch
          %1081 = sbr.rel (%p1079) target = $region64
        $region63: #{tpu_custom_call.1} parent=55 // pred_region
          %s1082 = sand.u32 %s176, 1
          %s1083 = scalar_lea.sflag [#allocation10], %s1082
          %s1084 = sand.u32 %s176, 1
          %s1085 = smul.addr %s1084, 32
          %s1086 = scalar_lea.vmem [#allocation9], %s1085
          %1087 = dma.done %s1083, 512
        $region64: #{tpu_custom_call.1} parent=55 // pred_fallthru
          _
      $region56: #{tpu_custom_call.1} parent=5 // pred_fallthru
        _
    $region6: #{tpu_custom_call.1} parent=1 // loop_footer
      %s27 = sadd.s32 1, %s23
    $region7: #{tpu_custom_call.1} parent=1 // loop_footer_branch
      %22 = sbr.rel target = $region3
    $region8: #{tpu_custom_call.1} parent=1 // loop_exit
      _
    %1088 = vsyncpa [#allocation3], 1
    %s1089 = scalar_lea.sflag [#allocation3], 1
    %1090 = vsyncpa %s1089, 1
    %1091 = vsyncpa [#allocation6], 1
    %s1092 = scalar_lea.sflag [#allocation6], 1
    %1093 = vsyncpa %s1092, 1
    %1094 = vsyncpa [#allocation4], 1
    %s1095 = scalar_lea.sflag [#allocation4], 1
    %1096 = vsyncpa %s1095, 1
    %1097 = vsyncpa [#allocation10], 1
    %s1098 = scalar_lea.sflag [#allocation10], 1
    %1099 = vsyncpa %s1098, 1

</llo_original>
